<compile_context>
chip_gen: v6e
topology: v6e:2x2x1
jax: 0.10.0
libtpu: 0.0.40
codegen_flags: <defaults>
</compile_context>

<pallas_src>
import functools
import math

import jax
import jax.numpy as jnp
from jax.experimental import pallas as pl
from jax.experimental.pallas import tpu as pltpu


def _cdiv(a, b):
    return -(-a // b)


def _round_up(x, m):
    return _cdiv(x, m) * m


def _embed_gather_kernel(ids_ref, table_hbm, out_ref, row_buf, sem, *, scale):
    # ids_ref   : SMEM (n_pad,) int32    -- flat token ids (scalar prefetch)
    # table_hbm : HBM  (vocab, d_model)  -- full table, never staged whole
    # out_ref   : VMEM (TR, d_model)     -- output tile for this grid step
    # row_buf   : VMEM (TR, d_model)     -- DMA landing buffer (scratch)
    # sem       : DMA semaphore shared by all TR row copies
    tr = row_buf.shape[0]
    base = pl.program_id(0) * tr

    # Issue TR independent row DMAs: table[ids[base + r]] -> row_buf[r].
    @pl.loop(0, tr)
    def _issue(r):
        tok = ids_ref[base + r]
        pltpu.make_async_copy(table_hbm.at[tok], row_buf.at[r], sem).start()

    # Wait for all TR copies (each wait consumes one row's worth of bytes).
    @pl.loop(0, tr)
    def _wait(r):
        pltpu.make_async_copy(table_hbm.at[0], row_buf.at[r], sem).wait()

    # Scale in f32, cast back to the table/output dtype; single dense store.
    out_ref[...] = (row_buf[...].astype(jnp.float32) * scale).astype(out_ref.dtype)


def embeddings_forward(token_ids, table, *, max_tr=256, vmem_cap_bytes=48 << 20):
    """token_ids: (batch, seq) int; table: (vocab, d_model)."""
    batch, seq = token_ids.shape
    vocab, d_model = table.shape
    n = batch * seq
    scale = float(math.sqrt(d_model))
    out_dtype = table.dtype
    itemsize = jnp.dtype(out_dtype).itemsize

    # --- row-tile size: enforce the VMEM budget, then balance the tiling ----
    # Per-row VMEM cost: landing buffer (1x) + double-buffered output block (2x).
    per_row = 3 * d_model * itemsize
    tr_vmem_cap = max(8, (vmem_cap_bytes // max(per_row, 1)) // 8 * 8)
    max_tr = max(8, min(max_tr, tr_vmem_cap))

    tiles = max(1, _cdiv(n, max_tr))
    tr = _round_up(_cdiv(n, tiles), 8)      # balanced -> <8 padded rows total
    n_pad = tr * tiles

    # --- flatten & pad ids (pad id 0 is a valid row; rows sliced off later) --
    flat_ids = token_ids.reshape(n).astype(jnp.int32)
    flat_ids = jnp.pad(flat_ids, (0, n_pad - n))

    # --- VMEM request (independent of vocab) --------------------------------
    footprint = 3 * tr * d_model * itemsize + (2 << 20)   # + internal scratch
    vmem_limit = int(min(max(footprint, 4 << 20), vmem_cap_bytes))

    kernel = functools.partial(_embed_gather_kernel, scale=scale)

    out_padded = pl.pallas_call(
        kernel,
        out_shape=jax.ShapeDtypeStruct((n_pad, d_model), out_dtype),
        grid_spec=pltpu.PrefetchScalarGridSpec(
            num_scalar_prefetch=1,                       # flat ids -> SMEM
            grid=(n_pad // tr,),
            in_specs=[
                pl.BlockSpec(memory_space=pl.ANY),       # table stays in HBM
            ],
            out_specs=pl.BlockSpec((tr, d_model), lambda i, ids: (i, 0)),
            scratch_shapes=[
                pltpu.VMEM((tr, d_model), out_dtype),    # gather landing buffer
                pltpu.SemaphoreType.DMA(()),             # shared DMA semaphore
            ],
        ),
        compiler_params=pltpu.CompilerParams(
            dimension_semantics=("parallel",),
            vmem_limit_bytes=vmem_limit,
        ),
    )(flat_ids, table)

    return out_padded[:n, :].reshape(batch, seq, d_model)


if __name__ == "__main__":
    d_model = 32
    vocab = 64
    batch, seq = 2, 8

    key = jax.random.PRNGKey(0)
    k_tab, k_idx = jax.random.split(key)

    # nn.Embedding default init: N(0, 1)
    table = jax.random.normal(k_tab, (vocab, d_model), dtype=jnp.float32)
    token_ids = jax.random.randint(k_idx, (batch, seq), 0, vocab, dtype=jnp.int32)

    out = embeddings_forward(token_ids, table)
    out = jax.block_until_ready(out)

    # reference check (plain JAX gather + scale) -- gather path is bit-exact
    ref = table[token_ids] * jnp.float32(math.sqrt(d_model))
    assert out.shape == (batch, seq, d_model)
    assert jnp.allclose(out, ref, atol=1e-6, rtol=1e-6), "mismatch vs reference"

    print("KERNEL_OK")
</pallas_src>

<mosaic_0001>
module attributes {stable_mosaic.version = 11 : i64} {
  func.func @_embed_gather_kernel(%arg0: i32, %arg1: memref<16xi32, #tpu.memory_space<smem>>, %arg2: memref<64x32xf32, #tpu.memory_space<any>>, %arg3: memref<16x32xf32, #tpu.memory_space<vmem>>, %arg4: memref<16x32xf32, #tpu.memory_space<vmem>>, %arg5: memref<!tpu.dma_semaphore, #tpu.memory_space<semaphore_mem>>) attributes {dimension_semantics = [#tpu.dimension_semantics<parallel>], iteration_bounds = array<i64: 1>, scalar_prefetch = 1 : i64, scratch_operands = 2 : i64, tpu.core_type = #tpu.core_type<tc>, window_params = [{}, {transform_indices = @transform_1, window_bounds = array<i64: 16, 32>}]} {
    %c16_i32 = arith.constant 16 : i32
    %0 = arith.muli %arg0, %c16_i32 : i32
    %c0_i32 = arith.constant 0 : i32
    %c16_i32_0 = arith.constant 16 : i32
    %1 = arith.addi %c0_i32, %c16_i32_0 : i32
    %c1_i32 = arith.constant 1 : i32
    scf.for %arg6 = %c0_i32 to %1 step %c1_i32  : i32 {
      %c1_i32_9 = arith.constant 1 : i32
      %7 = arith.muli %arg6, %c1_i32_9 : i32
      %c0_i32_10 = arith.constant 0 : i32
      %8 = arith.addi %c0_i32_10, %7 : i32
      %9 = arith.addi %0, %8 : i32
      %10 = arith.index_cast %9 : i32 to index
      %11 = memref.load %arg1[%10] : memref<16xi32, #tpu.memory_space<smem>>
      %c0_i32_11 = arith.constant 0 : i32
      %12 = tpu.memref_slice %arg2[%11, %c0_i32_11] : memref<64x32xf32, #tpu.memory_space<any>> -> memref<1x32xf32, #tpu.memory_space<any>>
      %13 = tpu.memref_squeeze %12 : memref<1x32xf32, #tpu.memory_space<any>> -> memref<32xf32, #tpu.memory_space<any>>
      %c0_i32_12 = arith.constant 0 : i32
      %14 = tpu.memref_slice %arg4[%8, %c0_i32_12] : memref<16x32xf32, #tpu.memory_space<vmem>> -> memref<1x32xf32, #tpu.memory_space<vmem>>
      %15 = tpu.memref_squeeze %14 : memref<1x32xf32, #tpu.memory_space<vmem>> -> memref<32xf32, #tpu.memory_space<vmem>>
      tpu.enqueue_dma source(%13 : memref<32xf32, #tpu.memory_space<any>>) target(%15 : memref<32xf32, #tpu.memory_space<vmem>>) target_semaphore(%arg5 : memref<!tpu.dma_semaphore, #tpu.memory_space<semaphore_mem>>)
    }
    %c16_i32_1 = arith.constant 16 : i32
    %c0_i32_2 = arith.constant 0 : i32
    %c16_i32_3 = arith.constant 16 : i32
    %2 = arith.addi %c0_i32_2, %c16_i32_3 : i32
    %c1_i32_4 = arith.constant 1 : i32
    scf.for %arg6 = %c0_i32_2 to %2 step %c1_i32_4  : i32 {
      %c1_i32_9 = arith.constant 1 : i32
      %7 = arith.muli %arg6, %c1_i32_9 : i32
      %c0_i32_10 = arith.constant 0 : i32
      %8 = arith.addi %c0_i32_10, %7 : i32
      %c0_i32_11 = arith.constant 0 : i32
      %c0_i32_12 = arith.constant 0 : i32
      %9 = tpu.memref_slice %arg2[%c0_i32_11, %c0_i32_12] : memref<64x32xf32, #tpu.memory_space<any>> -> memref<1x32xf32, #tpu.memory_space<any>>
      %10 = tpu.memref_squeeze %9 : memref<1x32xf32, #tpu.memory_space<any>> -> memref<32xf32, #tpu.memory_space<any>>
      %c0_i32_13 = arith.constant 0 : i32
      %11 = tpu.memref_slice %arg4[%8, %c0_i32_13] : memref<16x32xf32, #tpu.memory_space<vmem>> -> memref<1x32xf32, #tpu.memory_space<vmem>>
      %12 = tpu.memref_squeeze %11 : memref<1x32xf32, #tpu.memory_space<vmem>> -> memref<32xf32, #tpu.memory_space<vmem>>
      tpu.wait_dma2 semaphore(%arg5 : memref<!tpu.dma_semaphore, #tpu.memory_space<semaphore_mem>>) src(%10 : memref<32xf32, #tpu.memory_space<any>>) dst(%12 : memref<32xf32, #tpu.memory_space<vmem>>)
    }
    %c16_i32_5 = arith.constant 16 : i32
    %c0 = arith.constant 0 : index
    %c0_6 = arith.constant 0 : index
    %3 = vector.load %arg4[%c0, %c0_6] : memref<16x32xf32, #tpu.memory_space<vmem>>, vector<16x32xf32>
    %cst = arith.constant 5.65685415 : f32
    %4 = vector.broadcast %cst : f32 to vector<16x32xf32>
    %5 = arith.mulf %3, %4 : vector<16x32xf32>
    %c0_7 = arith.constant 0 : index
    %c0_8 = arith.constant 0 : index
    %6 = vector.load %arg3[%c0_7, %c0_8] : memref<16x32xf32, #tpu.memory_space<vmem>>, vector<16x32xf32>
    tpu.vector_store %arg3[%c0_7, %c0_8], %5 {strides = array<i32>} : memref<16x32xf32, #tpu.memory_space<vmem>>, vector<16x32xf32>,
    return
  }
  func.func @transform_1(%arg0: i32, %arg1: memref<16xi32, #tpu.memory_space<smem>>) -> (i32, i32) {
    %c0_i32 = arith.constant 0 : i32
    %c0_i32_0 = arith.constant 0 : i32
    return %arg0, %c0_i32 : i32, i32
  }
}

</mosaic_0001>

<llo_original>
// kernel: tpu_custom_call.1
$region0: #{tpu_custom_call.1}
  #allocation0 [shape = 'u32[]', space=smem, size = 0x4, offset = 0x4, fixed_abs, tag = 'smem constant byte address 0x4 - core index']
  #allocation1 [shape = 'u32[144,128]{1,0:T(1,128)}', space=vmem, size = 0x12000, scoped, tag = 'internal scratch']
  #allocation2 [shape = 'f32[16,32]{1,0:T(8,128)}', space=vmem, size = 0x2000, scoped, tag = 'scratch operand']
  #allocation3 [shape = 's32[1]{0}', space=sflag, size = 0x4, scoped, tag = 'scratch operand']
  #allocation4 [shape = 's32[1]{0}', space=sflag, size = 0x4, scoped, tag = 'scoped memory for tpu_custom_call.1']
  #allocation5 [shape = 'u8[512]{0}', space=smem, size = 0x200, scoped, tag = 'prefetched SMEM operand 0']
  #allocation8 [shape = 's32[]', space=sflag, size = 0x4, offset = 0, fixed_abs, tag = 'sflag constant byte address 0x0 - dummy sync flag']
  %s0 = inlined_call_operand.vmem [shape: s32[16], index: 0, kind: input, shape index: {}]
  %s1 = inlined_call_operand.vmem [shape: f32[64,32], index: 1, kind: input, shape index: {}]
  %s2 = inlined_call_operand.hbm [shape: f32[16,32], index: 2, kind: output, shape index: {}]
  %s3 = sld [smem:[#allocation0]]
  $region54: #{tpu_custom_call.1} parent=0
    _
  %s5 = ssub.s32 1, %s3
  %s6 = scalar_select 0, %s5, %s3
  %s7 = sshll.u32 %s0, 4
  %s8 = int_to_ptr.vmem [resolvable:$true] %s7
  %10 = dma.vmem_to_smem %s8, 16, [#allocation5], [#allocation4]
  %11 = dma.done [#allocation4], 16
  %12 = sfence
  $region1: #{tpu_custom_call.1} parent=0
    #allocation6 [shape = 'u8[8192]{0}', space=vmem, size = 0x2000, scoped, tag = 'output window, operand 0, single buffered']
    #allocation7 [shape = 's32[1]{0}', space=sflag, size = 0x4, scoped, tag = 'scoped memory for tpu_custom_call.1']
    %13 = vsyncpa [#allocation7], 0
    %s14 = smul.u32 0, 16
    loop: start=0, step=1, limit=16
    $region2: #{tpu_custom_call.1} parent=1 // loop_pre_header
      _
    $region3: #{tpu_custom_call.1} parent=1 // loop_header
      %s16 = sphi 0, %s20
      %p17 = scmp.ge.s32.totalorder %s16, 16
    $region4: #{tpu_custom_call.1} parent=1 // loop_header_branch
      %19 = sbr.rel (%p17) target = $region8
    $region5: #{tpu_custom_call.1} parent=1 // loop_body
      %s21 = sadd.s32 %s14, %s16
      %s22 = sld [smem:[#allocation5 + %s21]]
      %s23 = scalar_lea.vmem %s1, %s22
      %s24 = scalar_lea.vmem [#allocation2], %s16
      %p26 = scmp.lt.u32.totalorder 1, 8
      %p27 = pneg %p26
      // Predicated region
      $region9: #{tpu_custom_call.1} parent=5 // pred_check
        _
      $region10: #{tpu_custom_call.1} parent=5 // pred_check_branch
        %29 = sbr.rel (%p26) target = $region12
      $region11: #{tpu_custom_call.1} parent=5 // pred_region
        %s45 = sand.u32 1, 7
        %p46 = scmp.eq.s32.totalorder %s45, 0
        %p47 = pneg %p46
        // Predicated region
        $region24: #{tpu_custom_call.1} parent=11 // pred_check
          _
        $region25: #{tpu_custom_call.1} parent=11 // pred_check_branch
          %49 = sbr.rel (%p46) target = $region27
        $region26: #{tpu_custom_call.1} parent=11 // pred_region
          %s50 = sand.u32 1, 7
          %s51 = ssub.s32 1, %s50
          %s52 = scalar_lea.vmem %s23, %s51
          %s53 = ssub.s32 1, %s50
          %s54 = scalar_lea.vmem %s24, %s53 [#allocation2]
          %s55 = sshll.u32 1, %s50
          %s56 = ssub.s32 %s55, 1
          loop: start=0, step=1, limit=1
          $region28: #{tpu_custom_call.1} parent=26 // loop_pre_header
            _
          $region29: #{tpu_custom_call.1} parent=26 // loop_header
            %s58 = sphi 0, %s62
            %p59 = scmp.ge.s32.totalorder %s58, 1
            %s63 = sphi %s52, %s52
            %s64 = sphi %s54, %s54
          $region30: #{tpu_custom_call.1} parent=26 // loop_header_branch
            %61 = sbr.rel (%p59) target = $region34
          $region31: #{tpu_custom_call.1} parent=26 // loop_body
            %v65 = vld [vmem:[%s63] sm:%s56]
            %66 = vst [vmem:[%s64] sm:%s56] %v65
          $region32: #{tpu_custom_call.1} parent=26 // loop_footer
            %s62 = sadd.s32 1, %s58
          $region33: #{tpu_custom_call.1} parent=26 // loop_footer_branch
            %57 = sbr.rel target = $region29
          $region34: #{tpu_custom_call.1} parent=26 // loop_exit
            _
        $region27: #{tpu_custom_call.1} parent=11 // pred_fallthru
          _
      $region12: #{tpu_custom_call.1} parent=5 // pred_fallthru
        _
      // Predicated region
      $region13: #{tpu_custom_call.1} parent=5 // pred_check
        %p30 = pneg %p26
      $region14: #{tpu_custom_call.1} parent=5 // pred_check_branch
        %32 = sbr.rel (%p30) target = $region16
      $region15: #{tpu_custom_call.1} parent=5 // pred_region
        %s33 = sshll.u32 1, 1
        %s34 = ssub.s32 %s33, 1
        loop: start=0, step=1, limit=1
        $region17: #{tpu_custom_call.1} parent=15 // loop_pre_header
          _
        $region18: #{tpu_custom_call.1} parent=15 // loop_header
          %s36 = sphi 0, %s40
          %p37 = scmp.ge.s32.totalorder %s36, 1
          %s41 = sphi %s23, %s23
          %s42 = sphi %s24, %s24
        $region19: #{tpu_custom_call.1} parent=15 // loop_header_branch
          %39 = sbr.rel (%p37) target = $region23
        $region20: #{tpu_custom_call.1} parent=15 // loop_body
          %v43 = vld [vmem:[%s41] sm:%s34]
          %44 = vst [vmem:[%s42] sm:%s34] %v43
        $region21: #{tpu_custom_call.1} parent=15 // loop_footer
          %s40 = sadd.s32 1, %s36
        $region22: #{tpu_custom_call.1} parent=15 // loop_footer_branch
          %35 = sbr.rel target = $region18
        $region23: #{tpu_custom_call.1} parent=15 // loop_exit
          _
      $region16: #{tpu_custom_call.1} parent=5 // pred_fallthru
        _
      // Predicated region
      $region35: #{tpu_custom_call.1} parent=5 // pred_check
        _
      $region36: #{tpu_custom_call.1} parent=5 // pred_check_branch
        %69 = sbr.rel (0) target = $region38
      $region37: #{tpu_custom_call.1} parent=5 // pred_region
        %70 = vsyncadd [#allocation3], 16
      $region38: #{tpu_custom_call.1} parent=5 // pred_fallthru
        _
    $region6: #{tpu_custom_call.1} parent=1 // loop_footer
      %s20 = sadd.s32 1, %s16
    $region7: #{tpu_custom_call.1} parent=1 // loop_footer_branch
      %15 = sbr.rel target = $region3
    $region8: #{tpu_custom_call.1} parent=1 // loop_exit
      _
    loop: start=0, step=1, limit=16
    $region39: #{tpu_custom_call.1} parent=1 // loop_pre_header
      _
    $region40: #{tpu_custom_call.1} parent=1 // loop_header
      %s72 = sphi 0, %s76
      %p73 = scmp.ge.s32.totalorder %s72, 16
    $region41: #{tpu_custom_call.1} parent=1 // loop_header_branch
      %75 = sbr.rel (%p73) target = $region45
    $region42: #{tpu_custom_call.1} parent=1 // loop_body
      %78 = dma.done [#allocation3], 16
    $region43: #{tpu_custom_call.1} parent=1 // loop_footer
      %s76 = sadd.s32 1, %s72
    $region44: #{tpu_custom_call.1} parent=1 // loop_footer_branch
      %71 = sbr.rel target = $region40
    $region45: #{tpu_custom_call.1} parent=1 // loop_exit
      _
    %v79 = vld [vmem:[#allocation2] sm:$0xff]
    %v80 = vld [vmem:[#allocation2 + $0x8] sm:$0xff]
    %v81 = vmul.f32 %v79, 5.656854
    %v82 = vmul.f32 %v80, 5.656854
    %vm83 = vcmask 261120
    %84 = vst.msk [vmem:[#allocation6] sm:$0xff] %vm83, %v81
    %85 = vst.msk [vmem:[#allocation6 + $0x8] sm:$0xff] %vm83, %v82
    // Predicated region
    $region46: #{tpu_custom_call.1} parent=1 // pred_check
      _
    $region47: #{tpu_custom_call.1} parent=1 // pred_check_branch
      %87 = sbr.rel (0) target = $region49
    $region48: #{tpu_custom_call.1} parent=1 // pred_region
      %s89 = ssub.s32 256, 256
      %90 = vsyncadd [#allocation7], %s89
      %s91 = sshll.u32 [#allocation6], 4
      %s92 = int_to_ptr.vmem [resolvable:$true] %s91
      %97 = dma.vmem_to_hbm [thread:$0]  %s92, 256, %s2, [#allocation7], 128, 128, 8
    $region49: #{tpu_custom_call.1} parent=1 // pred_fallthru
      _
    // Predicated region
    $region50: #{tpu_custom_call.1} parent=1 // pred_check
      _
    $region51: #{tpu_custom_call.1} parent=1 // pred_check_branch
      %99 = sbr.rel (0) target = $region53
    $region52: #{tpu_custom_call.1} parent=1 // pred_region
      %100 = dma.done [#allocation7], 256
    $region53: #{tpu_custom_call.1} parent=1 // pred_fallthru
      _
    %101 = vsyncpa [#allocation7], 1
  %102 = vsyncmov [#allocation3]
  %s103 = vpop.sfrf %102
  %p104 = scmp.eq.s32.totalorder %s103, 0
  %p105 = pneg %p104
  %107 = shalt.err (%p105)

</llo_original>
